<compile_context>
chip_gen: v7x
topology: tpu7x:2x2x1
jax: 0.10.0
libtpu: 0.0.40
codegen_flags: <defaults>
</compile_context>

<pallas_src>
import math
import functools

import jax
import jax.numpy as jnp
from jax.experimental import pallas as pl
from jax.experimental.pallas import tpu as pltpu

NUM_GROUPS = 32
EPS = 1e-5
VMEM_LIMIT = 48 * 1024 * 1024  # below v7x's 64 MiB physical VMEM, well above default scoped limit


def _pick_tile(total, target):
    """Largest divisor of `total` that is <= target (preferring multiples of 8)."""
    if total <= target:
        return total
    best = None
    for t in range(target, 0, -1):
        if total % t == 0:
            if t % 8 == 0:
                return t
            if best is None:
                best = t
    return best if best is not None else total


# --------------------------------------------------------------------------------------
# Kernel 1: hoisted GroupNorm apply (per-channel FMA) + Q/K/V projections (bf16 MXU).
# --------------------------------------------------------------------------------------
def _gn_qkv_kernel(x_ref, scale_ref, shift_ref,
                   wq_ref, wk_ref, wv_ref, bq_ref, bk_ref, bv_ref,
                   q_ref, k_ref, v_ref):
    x = x_ref[...].astype(jnp.float32)                               # (TS, C)
    xn = (x * scale_ref[...] + shift_ref[...]).astype(jnp.bfloat16)  # fused per-channel FMA, f32
    q_ref[...] = (jnp.dot(xn, wq_ref[...], preferred_element_type=jnp.float32)
                  + bq_ref[...]).astype(q_ref.dtype)                 # 1/sqrt(C) folded into Wq/bq
    k_ref[...] = (jnp.dot(xn, wk_ref[...], preferred_element_type=jnp.float32)
                  + bk_ref[...]).astype(k_ref.dtype)
    v_ref[...] = (jnp.dot(xn, wv_ref[...], preferred_element_type=jnp.float32)
                  + bv_ref[...]).astype(v_ref.dtype)


# --------------------------------------------------------------------------------------
# Kernel 2: flash-style attention + output projection + residual (fused on last kv step).
# --------------------------------------------------------------------------------------
def _flash_attn_kernel(q_ref, k_ref, v_ref, x_ref, wo_ref, bo_ref, o_ref,
                       m_sc, l_sc, acc_sc):
    ki = pl.program_id(2)

    @pl.when(ki == 0)
    def _():
        m_sc[...] = jnp.full_like(m_sc, -jnp.inf)
        l_sc[...] = jnp.zeros_like(l_sc)
        acc_sc[...] = jnp.zeros_like(acc_sc)

    # (TQ, C) x (TK, C) -> (TQ, TK); bf16 operands, f32 accumulation on the MXU.
    s = jax.lax.dot_general(q_ref[...], k_ref[...],
                            (((1,), (1,)), ((), ())),
                            preferred_element_type=jnp.float32)

    m_prev = m_sc[...]
    m_new = jnp.maximum(m_prev, jnp.max(s, axis=-1, keepdims=True))
    alpha = jnp.exp(m_prev - m_new)                                  # EUP, f32
    p = jnp.exp(s - m_new)
    l_sc[...] = alpha * l_sc[...] + jnp.sum(p, axis=-1, keepdims=True)
    acc_sc[...] = alpha * acc_sc[...] + jnp.dot(
        p.astype(v_ref.dtype), v_ref[...], preferred_element_type=jnp.float32)
    m_sc[...] = m_new

    @pl.when(ki == pl.num_programs(2) - 1)
    def _():
        attn = acc_sc[...] * pl.reciprocal(l_sc[...], approx=True)
        out = jnp.dot(attn.astype(wo_ref.dtype), wo_ref[...],
                      preferred_element_type=jnp.float32) + bo_ref[...]
        o_ref[...] = (out + x_ref[...].astype(jnp.float32)).astype(o_ref.dtype)


# --------------------------------------------------------------------------------------
# Wrapper
# --------------------------------------------------------------------------------------
def vae_attention_block(x_nchw, params, *, tq=512, tk=512, ts=512):
    """x_nchw: (N, C, H, W) float32. Returns (N, C, H, W)."""
    n, c, h, w = x_nchw.shape
    assert c % NUM_GROUPS == 0
    hw = h * w
    cg = c // NUM_GROUPS

    tq = _pick_tile(hw, tq)
    tk = _pick_tile(hw, tk)
    ts = _pick_tile(hw, ts)

    # ---- GroupNorm statistics: cheap full-HW pre-pass (f32, biased var matches PyTorch) ----
    xf = x_nchw.astype(jnp.float32)
    xg = xf.reshape(n, NUM_GROUPS, cg * hw)
    mean = jnp.mean(xg, axis=2)                              # (N, G)
    var = jnp.var(xg, axis=2)                                # (N, G)
    inv = jax.lax.rsqrt(var + EPS)
    inv_c = jnp.repeat(inv, cg, axis=1)                      # (N, C)
    mean_c = jnp.repeat(mean, cg, axis=1)                    # (N, C)
    gamma = params["gamma"].astype(jnp.float32)
    beta = params["beta"].astype(jnp.float32)
    scale = (inv_c * gamma[None, :]).reshape(n, 1, c)        # xn = x*scale + shift
    shift = (beta[None, :] - mean_c * inv_c * gamma[None, :]).reshape(n, 1, c)

    # NCHW -> (N, HW, C): token-major layout so C sits on lanes for all matmuls.
    # TODO(synk): could be avoided by reading NCHW with a strided BlockSpec and transposing the
    #             (C, TS) tile in-kernel, or by keeping the sequence layout across adjacent ops.
    x_seq = jnp.transpose(xf.reshape(n, c, hw), (0, 2, 1))

    # ---- Weight prep: PyTorch Linear is y = x @ W.T + b; fold 1/sqrt(C) into Wq/bq; bf16 ----
    w_in = params["w_in"].astype(jnp.float32)                # (3C, C)
    b_in = params["b_in"].astype(jnp.float32)                # (3C,)
    qscale = 1.0 / math.sqrt(c)
    wq_t = (w_in[:c].T * qscale).astype(jnp.bfloat16)        # (C, C)
    wk_t = w_in[c:2 * c].T.astype(jnp.bfloat16)
    wv_t = w_in[2 * c:].T.astype(jnp.bfloat16)
    bq = (b_in[:c] * qscale).reshape(1, c).astype(jnp.float32)
    bk = b_in[c:2 * c].reshape(1, c).astype(jnp.float32)
    bv = b_in[2 * c:].reshape(1, c).astype(jnp.float32)
    wo_t = params["w_out"].T.astype(jnp.bfloat16)            # (C, C)
    bo = params["b_out"].reshape(1, c).astype(jnp.float32)   # (1, C)

    # ---- Pass 1: GroupNorm apply + Q/K/V projection ----
    ns = hw // ts
    const_spec_cc = pl.BlockSpec((c, c), lambda b, s: (0, 0))
    const_spec_1c = pl.BlockSpec((1, c), lambda b, s: (0, 0))
    q, k, v = pl.pallas_call(
        _gn_qkv_kernel,
        out_shape=(jax.ShapeDtypeStruct((n, hw, c), jnp.bfloat16),
                   jax.ShapeDtypeStruct((n, hw, c), jnp.bfloat16),
                   jax.ShapeDtypeStruct((n, hw, c), jnp.bfloat16)),
        grid=(n, ns),
        in_specs=[
            pl.BlockSpec((pl.Squeezed(), ts, c), lambda b, s: (b, s, 0)),  # x tile
            pl.BlockSpec((pl.Squeezed(), 1, c), lambda b, s: (b, 0, 0)),   # scale
            pl.BlockSpec((pl.Squeezed(), 1, c), lambda b, s: (b, 0, 0)),   # shift
            const_spec_cc, const_spec_cc, const_spec_cc,                   # Wq^T, Wk^T, Wv^T
            const_spec_1c, const_spec_1c, const_spec_1c,                   # bq, bk, bv
        ],
        out_specs=(
            pl.BlockSpec((pl.Squeezed(), ts, c), lambda b, s: (b, s, 0)),
            pl.BlockSpec((pl.Squeezed(), ts, c), lambda b, s: (b, s, 0)),
            pl.BlockSpec((pl.Squeezed(), ts, c), lambda b, s: (b, s, 0)),
        ),
        compiler_params=pltpu.CompilerParams(
            dimension_semantics=("parallel", "parallel"),
            vmem_limit_bytes=VMEM_LIMIT),
    )(x_seq, scale, shift, wq_t, wk_t, wv_t, bq, bk, bv)

    # ---- Pass 2: flash attention + out-proj + residual ----
    nq = hw // tq
    nk = hw // tk
    out_seq = pl.pallas_call(
        _flash_attn_kernel,
        out_shape=jax.ShapeDtypeStruct((n, hw, c), x_nchw.dtype),
        grid=(n, nq, nk),
        in_specs=[
            pl.BlockSpec((pl.Squeezed(), tq, c), lambda b, qi, ki: (b, qi, 0)),  # q
            pl.BlockSpec((pl.Squeezed(), tk, c), lambda b, qi, ki: (b, ki, 0)),  # k
            pl.BlockSpec((pl.Squeezed(), tk, c), lambda b, qi, ki: (b, ki, 0)),  # v
            pl.BlockSpec((pl.Squeezed(), tq, c), lambda b, qi, ki: (b, qi, 0)),  # x (residual)
            pl.BlockSpec((c, c), lambda b, qi, ki: (0, 0)),                      # Wo^T (bf16)
            pl.BlockSpec((1, c), lambda b, qi, ki: (0, 0)),                      # bo
        ],
        out_specs=pl.BlockSpec((pl.Squeezed(), tq, c), lambda b, qi, ki: (b, qi, 0)),
        scratch_shapes=[
            pltpu.VMEM((tq, 1), jnp.float32),   # running max
            pltpu.VMEM((tq, 1), jnp.float32),   # running denominator
            pltpu.VMEM((tq, c), jnp.float32),   # running accumulator
        ],
        compiler_params=pltpu.CompilerParams(
            dimension_semantics=("parallel", "parallel", "arbitrary"),
            vmem_limit_bytes=VMEM_LIMIT),
    )(q, k, v, x_seq, wo_t, bo)

    # (N, HW, C) -> NCHW
    return jnp.transpose(out_seq, (0, 2, 1)).reshape(n, c, h, w)


# --------------------------------------------------------------------------------------
# Pure-JAX reference (matches the PyTorch forward semantics).
# --------------------------------------------------------------------------------------
def reference(x, params):
    n, c, h, w = x.shape
    cg = c // NUM_GROUPS
    xg = x.reshape(n, NUM_GROUPS, cg, h, w)
    mean = xg.mean(axis=(2, 3, 4), keepdims=True)
    var = xg.var(axis=(2, 3, 4), keepdims=True)
    xn = (xg - mean) / jnp.sqrt(var + EPS)
    xn = xn.reshape(n, c, h, w) * params["gamma"][None, :, None, None] + params["beta"][None, :, None, None]

    xs = jnp.transpose(xn.reshape(n, c, h * w), (0, 2, 1))   # (N, HW, C)
    qkv = xs @ params["w_in"].T + params["b_in"]
    q, k, v = jnp.split(qkv, 3, axis=-1)
    logits = jnp.einsum("bqc,bkc->bqk", q, k) / math.sqrt(c)
    p = jax.nn.softmax(logits, axis=-1)
    attn = jnp.einsum("bqk,bkc->bqc", p, v)
    out = attn @ params["w_out"].T + params["b_out"]
    out = jnp.transpose(out, (0, 2, 1)).reshape(n, c, h, w)
    return out + x


def make_params(key, channels):
    ks = jax.random.split(key, 6)
    return {
        "gamma": 1.0 + 0.05 * jax.random.normal(ks[0], (channels,), jnp.float32),
        "beta": 0.05 * jax.random.normal(ks[1], (channels,), jnp.float32),
        "w_in": 0.05 * jax.random.normal(ks[2], (3 * channels, channels), jnp.float32),
        "b_in": 0.05 * jax.random.normal(ks[3], (3 * channels,), jnp.float32),
        "w_out": 0.05 * jax.random.normal(ks[4], (channels, channels), jnp.float32),
        "b_out": 0.05 * jax.random.normal(ks[5], (channels,), jnp.float32),
    }


if __name__ == "__main__":
    # GroupNorm(32, C) requires C % 32 == 0 -> smallest sensible synthetic C is 64.
    N, C, H, W = 2, 64, 8, 8
    key = jax.random.PRNGKey(0)
    kx, kp = jax.random.split(key)
    x = jax.random.normal(kx, (N, C, H, W), jnp.float32)
    params = make_params(kp, C)

    y = vae_attention_block(x, params)
    y = jax.block_until_ready(y)

    y_ref = reference(x, params)
    err = float(jnp.max(jnp.abs(y - y_ref)))
    assert y.shape == (N, C, H, W)
    assert err < 2e-2, f"mismatch vs reference: max abs err = {err}"
    print("KERNEL_OK")
</pallas_src>

<mosaic_0001>
module attributes {stable_mosaic.version = 11 : i64} {
  func.func @_gn_qkv_kernel(%arg0: i32, %arg1: i32, %arg2: memref<1x64x64xf32, #tpu.memory_space<vmem>>, %arg3: memref<1x1x64xf32, #tpu.memory_space<vmem>>, %arg4: memref<1x1x64xf32, #tpu.memory_space<vmem>>, %arg5: memref<64x64xbf16, #tpu.memory_space<vmem>>, %arg6: memref<64x64xbf16, #tpu.memory_space<vmem>>, %arg7: memref<64x64xbf16, #tpu.memory_space<vmem>>, %arg8: memref<1x64xf32, #tpu.memory_space<vmem>>, %arg9: memref<1x64xf32, #tpu.memory_space<vmem>>, %arg10: memref<1x64xf32, #tpu.memory_space<vmem>>, %arg11: memref<1x64x64xbf16, #tpu.memory_space<vmem>>, %arg12: memref<1x64x64xbf16, #tpu.memory_space<vmem>>, %arg13: memref<1x64x64xbf16, #tpu.memory_space<vmem>>) attributes {dimension_semantics = [#tpu.dimension_semantics<parallel>, #tpu.dimension_semantics<parallel>], iteration_bounds = array<i64: 2, 1>, scalar_prefetch = 0 : i64, scratch_operands = 0 : i64, tpu.core_type = #tpu.core_type<tc>, window_params = [{transform_indices = @transform_0, window_bounds = array<i64: 1, 64, 64>}, {transform_indices = @transform_1, window_bounds = array<i64: 1, 1, 64>}, {transform_indices = @transform_2, window_bounds = array<i64: 1, 1, 64>}, {pipeline_mode = #tpu.pipeline_mode<synchronous>, transform_indices = @transform_3, window_bounds = array<i64: 64, 64>}, {pipeline_mode = #tpu.pipeline_mode<synchronous>, transform_indices = @transform_4, window_bounds = array<i64: 64, 64>}, {pipeline_mode = #tpu.pipeline_mode<synchronous>, transform_indices = @transform_5, window_bounds = array<i64: 64, 64>}, {pipeline_mode = #tpu.pipeline_mode<synchronous>, transform_indices = @transform_6, window_bounds = array<i64: 1, 64>}, {pipeline_mode = #tpu.pipeline_mode<synchronous>, transform_indices = @transform_7, window_bounds = array<i64: 1, 64>}, {pipeline_mode = #tpu.pipeline_mode<synchronous>, transform_indices = @transform_8, window_bounds = array<i64: 1, 64>}, {transform_indices = @transform_9, window_bounds = array<i64: 1, 64, 64>}, {transform_indices = @transform_10, window_bounds = array<i64: 1, 64, 64>}, {transform_indices = @transform_11, window_bounds = array<i64: 1, 64, 64>}]} {
    %c0 = arith.constant 0 : index
    %c0_0 = arith.constant 0 : index
    %c0_1 = arith.constant 0 : index
    %0 = vector.load %arg2[%c0, %c0_0, %c0_1] : memref<1x64x64xf32, #tpu.memory_space<vmem>>, vector<1x64x64xf32>
    %1 = vector.shape_cast %0 : vector<1x64x64xf32> to vector<64x64xf32>
    %c0_2 = arith.constant 0 : index
    %c0_3 = arith.constant 0 : index
    %c0_4 = arith.constant 0 : index
    %2 = vector.load %arg3[%c0_2, %c0_3, %c0_4] : memref<1x1x64xf32, #tpu.memory_space<vmem>>, vector<1x1x64xf32>
    %3 = vector.shape_cast %2 : vector<1x1x64xf32> to vector<1x64xf32>
    %4 = vector.broadcast %3 : vector<1x64xf32> to vector<64x64xf32>
    %5 = arith.mulf %1, %4 : vector<64x64xf32>
    %c0_5 = arith.constant 0 : index
    %c0_6 = arith.constant 0 : index
    %c0_7 = arith.constant 0 : index
    %6 = vector.load %arg4[%c0_5, %c0_6, %c0_7] : memref<1x1x64xf32, #tpu.memory_space<vmem>>, vector<1x1x64xf32>
    %7 = vector.shape_cast %6 : vector<1x1x64xf32> to vector<1x64xf32>
    %8 = vector.broadcast %7 : vector<1x64xf32> to vector<64x64xf32>
    %9 = arith.addf %5, %8 : vector<64x64xf32>
    %10 = arith.truncf %9 : vector<64x64xf32> to vector<64x64xbf16>
    %c0_8 = arith.constant 0 : index
    %c0_9 = arith.constant 0 : index
    %11 = vector.load %arg5[%c0_8, %c0_9] : memref<64x64xbf16, #tpu.memory_space<vmem>>, vector<64x64xbf16>
    %cst = arith.constant dense<0.000000e+00> : vector<64x64xf32>
    %12 = tpu.matmul %10, %11, %cst {dimension_numbers = #tpu.dot_dimension_numbers<[1], [0], [0], [1], [0, 0, 1, 1], [], []>} : vector<64x64xbf16>, vector<64x64xbf16>, vector<64x64xf32> -> vector<64x64xf32>
    %c0_10 = arith.constant 0 : index
    %c0_11 = arith.constant 0 : index
    %13 = vector.load %arg8[%c0_10, %c0_11] : memref<1x64xf32, #tpu.memory_space<vmem>>, vector<1x64xf32>
    %14 = vector.broadcast %13 : vector<1x64xf32> to vector<64x64xf32>
    %15 = arith.addf %12, %14 : vector<64x64xf32>
    %16 = arith.truncf %15 : vector<64x64xf32> to vector<64x64xbf16>
    %c0_12 = arith.constant 0 : index
    %c0_13 = arith.constant 0 : index
    %c0_14 = arith.constant 0 : index
    %17 = vector.load %arg11[%c0_12, %c0_13, %c0_14] : memref<1x64x64xbf16, #tpu.memory_space<vmem>>, vector<1x64x64xbf16>
    %18 = vector.shape_cast %17 : vector<1x64x64xbf16> to vector<64x64xbf16>
    %19 = vector.shape_cast %16 : vector<64x64xbf16> to vector<1x64x64xbf16>
    tpu.vector_store %arg11[%c0_12, %c0_13, %c0_14], %19 {strides = array<i32>} : memref<1x64x64xbf16, #tpu.memory_space<vmem>>, vector<1x64x64xbf16>,
    %c0_15 = arith.constant 0 : index
    %c0_16 = arith.constant 0 : index
    %20 = vector.load %arg6[%c0_15, %c0_16] : memref<64x64xbf16, #tpu.memory_space<vmem>>, vector<64x64xbf16>
    %cst_17 = arith.constant dense<0.000000e+00> : vector<64x64xf32>
    %21 = tpu.matmul %10, %20, %cst_17 {dimension_numbers = #tpu.dot_dimension_numbers<[1], [0], [0], [1], [0, 0, 1, 1], [], []>} : vector<64x64xbf16>, vector<64x64xbf16>, vector<64x64xf32> -> vector<64x64xf32>
    %c0_18 = arith.constant 0 : index
    %c0_19 = arith.constant 0 : index
    %22 = vector.load %arg9[%c0_18, %c0_19] : memref<1x64xf32, #tpu.memory_space<vmem>>, vector<1x64xf32>
    %23 = vector.broadcast %22 : vector<1x64xf32> to vector<64x64xf32>
    %24 = arith.addf %21, %23 : vector<64x64xf32>
    %25 = arith.truncf %24 : vector<64x64xf32> to vector<64x64xbf16>
    %c0_20 = arith.constant 0 : index
    %c0_21 = arith.constant 0 : index
    %c0_22 = arith.constant 0 : index
    %26 = vector.load %arg12[%c0_20, %c0_21, %c0_22] : memref<1x64x64xbf16, #tpu.memory_space<vmem>>, vector<1x64x64xbf16>
    %27 = vector.shape_cast %26 : vector<1x64x64xbf16> to vector<64x64xbf16>
    %28 = vector.shape_cast %25 : vector<64x64xbf16> to vector<1x64x64xbf16>
    tpu.vector_store %arg12[%c0_20, %c0_21, %c0_22], %28 {strides = array<i32>} : memref<1x64x64xbf16, #tpu.memory_space<vmem>>, vector<1x64x64xbf16>,
    %c0_23 = arith.constant 0 : index
    %c0_24 = arith.constant 0 : index
    %29 = vector.load %arg7[%c0_23, %c0_24] : memref<64x64xbf16, #tpu.memory_space<vmem>>, vector<64x64xbf16>
    %cst_25 = arith.constant dense<0.000000e+00> : vector<64x64xf32>
    %30 = tpu.matmul %10, %29, %cst_25 {dimension_numbers = #tpu.dot_dimension_numbers<[1], [0], [0], [1], [0, 0, 1, 1], [], []>} : vector<64x64xbf16>, vector<64x64xbf16>, vector<64x64xf32> -> vector<64x64xf32>
    %c0_26 = arith.constant 0 : index
    %c0_27 = arith.constant 0 : index
    %31 = vector.load %arg10[%c0_26, %c0_27] : memref<1x64xf32, #tpu.memory_space<vmem>>, vector<1x64xf32>
    %32 = vector.broadcast %31 : vector<1x64xf32> to vector<64x64xf32>
    %33 = arith.addf %30, %32 : vector<64x64xf32>
    %34 = arith.truncf %33 : vector<64x64xf32> to vector<64x64xbf16>
    %c0_28 = arith.constant 0 : index
    %c0_29 = arith.constant 0 : index
    %c0_30 = arith.constant 0 : index
    %35 = vector.load %arg13[%c0_28, %c0_29, %c0_30] : memref<1x64x64xbf16, #tpu.memory_space<vmem>>, vector<1x64x64xbf16>
    %36 = vector.shape_cast %35 : vector<1x64x64xbf16> to vector<64x64xbf16>
    %37 = vector.shape_cast %34 : vector<64x64xbf16> to vector<1x64x64xbf16>
    tpu.vector_store %arg13[%c0_28, %c0_29, %c0_30], %37 {strides = array<i32>} : memref<1x64x64xbf16, #tpu.memory_space<vmem>>, vector<1x64x64xbf16>,
    return
  }
  func.func @transform_0(%arg0: i32, %arg1: i32) -> (i32, i32, i32) {
    %c0_i32 = arith.constant 0 : i32
    %c0_i32_0 = arith.constant 0 : i32
    return %arg0, %arg1, %c0_i32 : i32, i32, i32
  }
  func.func @transform_1(%arg0: i32, %arg1: i32) -> (i32, i32, i32) {
    %c0_i32 = arith.constant 0 : i32
    %c0_i32_0 = arith.constant 0 : i32
    %c0_i32_1 = arith.constant 0 : i32
    return %arg0, %c0_i32, %c0_i32_0 : i32, i32, i32
  }
  func.func @transform_2(%arg0: i32, %arg1: i32) -> (i32, i32, i32) {
    %c0_i32 = arith.constant 0 : i32
    %c0_i32_0 = arith.constant 0 : i32
    %c0_i32_1 = arith.constant 0 : i32
    return %arg0, %c0_i32, %c0_i32_0 : i32, i32, i32
  }
  func.func @transform_3(%arg0: i32, %arg1: i32) -> (i32, i32) {
    %c0_i32 = arith.constant 0 : i32
    %c0_i32_0 = arith.constant 0 : i32
    %c0_i32_1 = arith.constant 0 : i32
    return %c0_i32, %c0_i32_0 : i32, i32
  }
  func.func @transform_4(%arg0: i32, %arg1: i32) -> (i32, i32) {
    %c0_i32 = arith.constant 0 : i32
    %c0_i32_0 = arith.constant 0 : i32
    %c0_i32_1 = arith.constant 0 : i32
    return %c0_i32, %c0_i32_0 : i32, i32
  }
  func.func @transform_5(%arg0: i32, %arg1: i32) -> (i32, i32) {
    %c0_i32 = arith.constant 0 : i32
    %c0_i32_0 = arith.constant 0 : i32
    %c0_i32_1 = arith.constant 0 : i32
    return %c0_i32, %c0_i32_0 : i32, i32
  }
  func.func @transform_6(%arg0: i32, %arg1: i32) -> (i32, i32) {
    %c0_i32 = arith.constant 0 : i32
    %c0_i32_0 = arith.constant 0 : i32
    %c0_i32_1 = arith.constant 0 : i32
    return %c0_i32, %c0_i32_0 : i32, i32
  }
  func.func @transform_7(%arg0: i32, %arg1: i32) -> (i32, i32) {
    %c0_i32 = arith.constant 0 : i32
    %c0_i32_0 = arith.constant 0 : i32
    %c0_i32_1 = arith.constant 0 : i32
    return %c0_i32, %c0_i32_0 : i32, i32
  }
  func.func @transform_8(%arg0: i32, %arg1: i32) -> (i32, i32) {
    %c0_i32 = arith.constant 0 : i32
    %c0_i32_0 = arith.constant 0 : i32
    %c0_i32_1 = arith.constant 0 : i32
    return %c0_i32, %c0_i32_0 : i32, i32
  }
  func.func @transform_9(%arg0: i32, %arg1: i32) -> (i32, i32, i32) {
    %c0_i32 = arith.constant 0 : i32
    %c0_i32_0 = arith.constant 0 : i32
    return %arg0, %arg1, %c0_i32 : i32, i32, i32
  }
  func.func @transform_10(%arg0: i32, %arg1: i32) -> (i32, i32, i32) {
    %c0_i32 = arith.constant 0 : i32
    %c0_i32_0 = arith.constant 0 : i32
    return %arg0, %arg1, %c0_i32 : i32, i32, i32
  }
  func.func @transform_11(%arg0: i32, %arg1: i32) -> (i32, i32, i32) {
    %c0_i32 = arith.constant 0 : i32
    %c0_i32_0 = arith.constant 0 : i32
    return %arg0, %arg1, %c0_i32 : i32, i32, i32
  }
}

</mosaic_0001>

<llo_original>
// kernel: tpu_custom_call.1
$region0: #{tpu_custom_call.1}
  #allocation0 [shape = 'u32[]', space=smem, size = 0x4, offset = 0x4, fixed_abs, tag = 'smem constant byte address 0x4 - core index']
  #allocation1 [shape = 'u32[144,128]{1,0:T(1,128)}', space=vmem, size = 0x12000, scoped, tag = 'internal scratch']
  %s0 = inlined_call_operand.hbm [shape: f32[2,64,64], index: 0, kind: input, shape index: {}]
  %s1 = inlined_call_operand.vmem [shape: f32[2,1,64], index: 1, kind: input, shape index: {}]
  %s2 = inlined_call_operand.vmem [shape: f32[2,1,64], index: 2, kind: input, shape index: {}]
  %s3 = inlined_call_operand.hbm [shape: bf16[64,64], index: 3, kind: input, shape index: {}]
  %s4 = inlined_call_operand.hbm [shape: bf16[64,64], index: 4, kind: input, shape index: {}]
  %s5 = inlined_call_operand.hbm [shape: bf16[64,64], index: 5, kind: input, shape index: {}]
  %s6 = inlined_call_operand.vmem [shape: f32[1,64], index: 6, kind: input, shape index: {}]
  %s7 = inlined_call_operand.vmem [shape: f32[1,64], index: 7, kind: input, shape index: {}]
  %s8 = inlined_call_operand.vmem [shape: f32[1,64], index: 8, kind: input, shape index: {}]
  %s9 = inlined_call_operand.hbm [shape: bf16[2,64,64], index: 9, kind: output, shape index: {0}]
  %s10 = inlined_call_operand.hbm [shape: bf16[2,64,64], index: 10, kind: output, shape index: {1}]
  %s11 = inlined_call_operand.hbm [shape: bf16[2,64,64], index: 11, kind: output, shape index: {2}]
  %12 = xla_tuple %s9, %s10, %s11
  %s13 = sld [smem:[#allocation0]]
  $region101: #{tpu_custom_call.1} parent=0
    _
  %s15 = ssub.s32 1, %s13
  %s16 = scalar_select 0, %s15, %s13
  $region1: #{tpu_custom_call.1} parent=0
    #allocation2 [shape = 'u8[65536]{0}', space=vmem, size = 0x10000, scoped, tag = 'input window, operand 0']
    #allocation3 [shape = 's32[2]{0}', space=sflag, size = 0x8, scoped, tag = 'scoped memory for tpu_custom_call.1']
    #allocation4 [shape = 's32[2]{0}', space=sflag, size = 0x8, scoped, tag = 'scoped memory for tpu_custom_call.1']
    #allocation5 [shape = 'u8[16384]{0}', space=vmem, size = 0x4000, scoped, tag = 'input window, operand 3, single buffered']
    #allocation6 [shape = 's32[1]{0}', space=sflag, size = 0x4, scoped, tag = 'scoped memory for tpu_custom_call.1']
    #allocation7 [shape = 'u8[16384]{0}', space=vmem, size = 0x4000, scoped, tag = 'input window, operand 4, single buffered']
    #allocation8 [shape = 'u8[16384]{0}', space=vmem, size = 0x4000, scoped, tag = 'input window, operand 5, single buffered']
    #allocation9 [shape = 's32[1]{0}', space=sflag, size = 0x4, scoped, tag = 'scoped memory for tpu_custom_call.1']
    #allocation10 [shape = 'u8[32768]{0}', space=vmem, size = 0x8000, scoped, tag = 'output window, operand 0']
    #allocation11 [shape = 'u8[32768]{0}', space=vmem, size = 0x8000, scoped, tag = 'output window, operand 1']
    #allocation12 [shape = 's32[2]{0}', space=sflag, size = 0x8, scoped, tag = 'scoped memory for tpu_custom_call.1']
    #allocation13 [shape = 'u8[32768]{0}', space=vmem, size = 0x8000, scoped, tag = 'output window, operand 2']
    %17 = vsyncpa [#allocation3], 0
    %s18 = scalar_lea.sflag [#allocation3], 1
    %19 = vsyncpa %s18, 0
    %20 = vsyncpa [#allocation6], 0
    %21 = vsyncpa [#allocation9], 0
    %22 = vsyncpa [#allocation4], 0
    %s23 = scalar_lea.sflag [#allocation4], 1
    %24 = vsyncpa %s23, 0
    %25 = vsyncpa [#allocation12], 0
    %s26 = scalar_lea.sflag [#allocation12], 1
    %27 = vsyncpa %s26, 0
    loop: start=0, step=1, limit=4
    $region2: #{tpu_custom_call.1} parent=1 // loop_pre_header
      _
    $region3: #{tpu_custom_call.1} parent=1 // loop_header
      %s29 = sphi 0, %s33
      %p30 = scmp.ge.s32.totalorder %s29, 4
      %s36 = sphi 0, %s48
      %s37 = sphi 0, %s44
      %s38 = sphi 0, %s36
      %s39 = sphi 0, %s37
      %s40 = sphi 0, %s38
      %s41 = sphi 0, %s39
      %s53 = sphi 0, %s55
      %s56 = sphi 0, %s53
      %s57 = sphi 0, %s56
      %s73 = sphi 0, %s57
      %s79 = sphi 0, %s81
      %s82 = sphi 0, %s79
      %s83 = sphi 0, %s82
      %s99 = sphi 0, %s83
      %s105 = sphi 0, %s107
      %s108 = sphi 0, %s105
      %s109 = sphi 0, %s108
      %s125 = sphi 0, %s109
      %s129 = sphi 0, %s129
      %s131 = sphi 0, %s129
      %s132 = sphi 0, %s131
      %s146 = sphi 0, %s132
      %s150 = sphi 0, %s150
      %s152 = sphi 0, %s150
      %s153 = sphi 0, %s152
      %s167 = sphi 0, %s153
      %s171 = sphi 0, %s171
      %s173 = sphi 0, %s171
      %s174 = sphi 0, %s173
      %s188 = sphi 0, %s174
      %s192 = sphi 0, %s192
      %s194 = sphi 0, %s192
      %s195 = sphi 0, %s194
      %s209 = sphi 0, %s195
      %s213 = sphi 0, %s213
      %s215 = sphi 0, %s213
      %s216 = sphi 0, %s215
      %s230 = sphi 0, %s216
      %s234 = sphi 0, %s234
      %s236 = sphi 0, %s234
      %s237 = sphi 0, %s236
      %s251 = sphi 0, %s237
      %s259 = sphi 0, %s261
      %s262 = sphi 0, %s259
      %s263 = sphi 0, %s262
      %s279 = sphi 0, %s263
      %s287 = sphi 0, %s289
      %s290 = sphi 0, %s287
      %s291 = sphi 0, %s290
      %s307 = sphi 0, %s291
      %s315 = sphi 0, %s317
      %s318 = sphi 0, %s315
      %s319 = sphi 0, %s318
      %s335 = sphi 0, %s319
    $region4: #{tpu_custom_call.1} parent=1 // loop_header_branch
      %32 = sbr.rel (%p30) target = $region8
    $region5: #{tpu_custom_call.1} parent=1 // loop_body
      %s34 = ssub.s32 %s29, 1
      %s35 = ssub.s32 %s29, 2
      %s42 = sadd.s32 1, %s37
      %p43 = scmp.ge.s32.totalorder %s42, 1
      %s44 = scalar_select %p43, 0, %s42
      %s45 = sadd.s32 1, %s36
      %s46 = scalar_select %p43, %s45, %s36
      %p47 = scmp.ge.s32.totalorder %s46, 2
      %s48 = scalar_select %p47, 0, %s46
      %s49 = ssub.s32 %s36, %s48
      %s50 = ssub.s32 %s37, %s44
      %s51 = sor.u32 %s49, %s50
      %p52 = scmp.eq.s32.totalorder %s51, 0
      %s54 = sadd.s32 %s53, 1
      %s55 = scalar_select %p52, %s53, %s54
      %p58 = pneg %p52
      %p59 = scmp.eq.s32.totalorder %s29, 1
      %p60 = por %p58, %p59
      %p61 = scmp.ne.s32.totalorder %s53, %s56
      %p62 = scmp.eq.s32.totalorder %s29, 0
      %p63 = por %p61, %p62
      %p64 = scmp.ne.s32.totalorder %s53, %s56
      %p65 = scmp.eq.s32.totalorder %s34, 1
      %p66 = por %p64, %p65
      %p67 = scmp.ne.s32.totalorder %s56, %s57
      %p68 = scmp.eq.s32.totalorder %s34, 0
      %p69 = por %p67, %p68
      %p70 = scmp.ne.s32.totalorder %s56, %s57
      %p71 = scmp.eq.s32.totalorder %s35, 1
      %p72 = por %p70, %p71
      %p74 = scmp.ne.s32.totalorder %s57, %s73
      %p75 = scmp.eq.s32.totalorder %s35, 0
      %p76 = por %p74, %p75
      %s77 = ssub.s32 %s36, %s48
      %p78 = scmp.eq.s32.totalorder %s77, 0
      %s80 = sadd.s32 %s79, 1
      %s81 = scalar_select %p78, %s79, %s80
      %p84 = pneg %p78
      %p85 = scmp.eq.s32.totalorder %s29, 1
      %p86 = por %p84, %p85
      %p87 = scmp.ne.s32.totalorder %s79, %s82
      %p88 = scmp.eq.s32.totalorder %s29, 0
      %p89 = por %p87, %p88
      %p90 = scmp.ne.s32.totalorder %s79, %s82
      %p91 = scmp.eq.s32.totalorder %s34, 1
      %p92 = por %p90, %p91
      %p93 = scmp.ne.s32.totalorder %s82, %s83
      %p94 = scmp.eq.s32.totalorder %s34, 0
      %p95 = por %p93, %p94
      %p96 = scmp.ne.s32.totalorder %s82, %s83
      %p97 = scmp.eq.s32.totalorder %s35, 1
      %p98 = por %p96, %p97
      %p100 = scmp.ne.s32.totalorder %s83, %s99
      %p101 = scmp.eq.s32.totalorder %s35, 0
      %p102 = por %p100, %p101
      %s103 = ssub.s32 %s36, %s48
      %p104 = scmp.eq.s32.totalorder %s103, 0
      %s106 = sadd.s32 %s105, 1
      %s107 = scalar_select %p104, %s105, %s106
      %p110 = pneg %p104
      %p111 = scmp.eq.s32.totalorder %s29, 1
      %p112 = por %p110, %p111
      %p113 = scmp.ne.s32.totalorder %s105, %s108
      %p114 = scmp.eq.s32.totalorder %s29, 0
      %p115 = por %p113, %p114
      %p116 = scmp.ne.s32.totalorder %s105, %s108
      %p117 = scmp.eq.s32.totalorder %s34, 1
      %p118 = por %p116, %p117
      %p119 = scmp.ne.s32.totalorder %s108, %s109
      %p120 = scmp.eq.s32.totalorder %s34, 0
      %p121 = por %p119, %p120
      %p122 = scmp.ne.s32.totalorder %s108, %s109
      %p123 = scmp.eq.s32.totalorder %s35, 1
      %p124 = por %p122, %p123
      %p126 = scmp.ne.s32.totalorder %s109, %s125
      %p127 = scmp.eq.s32.totalorder %s35, 0
      %p128 = por %p126, %p127
      %s130 = sadd.s32 %s129, 1
      %p133 = scmp.eq.s32.totalorder %s29, 1
      %p134 = scmp.ne.s32.totalorder %s129, %s131
      %p135 = scmp.eq.s32.totalorder %s29, 0
      %p136 = por %p134, %p135
      %p137 = scmp.ne.s32.totalorder %s129, %s131
      %p138 = scmp.eq.s32.totalorder %s34, 1
      %p139 = por %p137, %p138
      %p140 = scmp.ne.s32.totalorder %s131, %s132
      %p141 = scmp.eq.s32.totalorder %s34, 0
      %p142 = por %p140, %p141
      %p143 = scmp.ne.s32.totalorder %s131, %s132
      %p144 = scmp.eq.s32.totalorder %s35, 1
      %p145 = por %p143, %p144
      %p147 = scmp.ne.s32.totalorder %s132, %s146
      %p148 = scmp.eq.s32.totalorder %s35, 0
      %p149 = por %p147, %p148
      %s151 = sadd.s32 %s150, 1
      %p154 = scmp.eq.s32.totalorder %s29, 1
      %p155 = scmp.ne.s32.totalorder %s150, %s152
      %p156 = scmp.eq.s32.totalorder %s29, 0
      %p157 = por %p155, %p156
      %p158 = scmp.ne.s32.totalorder %s150, %s152
      %p159 = scmp.eq.s32.totalorder %s34, 1
      %p160 = por %p158, %p159
      %p161 = scmp.ne.s32.totalorder %s152, %s153
      %p162 = scmp.eq.s32.totalorder %s34, 0
      %p163 = por %p161, %p162
      %p164 = scmp.ne.s32.totalorder %s152, %s153
      %p165 = scmp.eq.s32.totalorder %s35, 1
      %p166 = por %p164, %p165
      %p168 = scmp.ne.s32.totalorder %s153, %s167
      %p169 = scmp.eq.s32.totalorder %s35, 0
      %p170 = por %p168, %p169
      %s172 = sadd.s32 %s171, 1
      %p175 = scmp.eq.s32.totalorder %s29, 1
      %p176 = scmp.ne.s32.totalorder %s171, %s173
      %p177 = scmp.eq.s32.totalorder %s29, 0
      %p178 = por %p176, %p177
      %p179 = scmp.ne.s32.totalorder %s171, %s173
      %p180 = scmp.eq.s32.totalorder %s34, 1
      %p181 = por %p179, %p180
      %p182 = scmp.ne.s32.totalorder %s173, %s174
      %p183 = scmp.eq.s32.totalorder %s34, 0
      %p184 = por %p182, %p183
      %p185 = scmp.ne.s32.totalorder %s173, %s174
      %p186 = scmp.eq.s32.totalorder %s35, 1
      %p187 = por %p185, %p186
      %p189 = scmp.ne.s32.totalorder %s174, %s188
      %p190 = scmp.eq.s32.totalorder %s35, 0
      %p191 = por %p189, %p190
      %s193 = sadd.s32 %s192, 1
      %p196 = scmp.eq.s32.totalorder %s29, 1
      %p197 = scmp.ne.s32.totalorder %s192, %s194
      %p198 = scmp.eq.s32.totalorder %s29, 0
      %p199 = por %p197, %p198
      %p200 = scmp.ne.s32.totalorder %s192, %s194
      %p201 = scmp.eq.s32.totalorder %s34, 1
      %p202 = por %p200, %p201
      %p203 = scmp.ne.s32.totalorder %s194, %s195
      %p204 = scmp.eq.s32.totalorder %s34, 0
      %p205 = por %p203, %p204
      %p206 = scmp.ne.s32.totalorder %s194, %s195
      %p207 = scmp.eq.s32.totalorder %s35, 1
      %p208 = por %p206, %p207
      %p210 = scmp.ne.s32.totalorder %s195, %s209
      %p211 = scmp.eq.s32.totalorder %s35, 0
      %p212 = por %p210, %p211
      %s214 = sadd.s32 %s213, 1
      %p217 = scmp.eq.s32.totalorder %s29, 1
      %p218 = scmp.ne.s32.totalorder %s213, %s215
      %p219 = scmp.eq.s32.totalorder %s29, 0
      %p220 = por %p218, %p219
      %p221 = scmp.ne.s32.totalorder %s213, %s215
      %p222 = scmp.eq.s32.totalorder %s34, 1
      %p223 = por %p221, %p222
      %p224 = scmp.ne.s32.totalorder %s215, %s216
      %p225 = scmp.eq.s32.totalorder %s34, 0
      %p226 = por %p224, %p225
      %p227 = scmp.ne.s32.totalorder %s215, %s216
      %p228 = scmp.eq.s32.totalorder %s35, 1
      %p229 = por %p227, %p228
      %p231 = scmp.ne.s32.totalorder %s216, %s230
      %p232 = scmp.eq.s32.totalorder %s35, 0
      %p233 = por %p231, %p232
      %s235 = sadd.s32 %s234, 1
      %p238 = scmp.eq.s32.totalorder %s29, 1
      %p239 = scmp.ne.s32.totalorder %s234, %s236
      %p240 = scmp.eq.s32.totalorder %s29, 0
      %p241 = por %p239, %p240
      %p242 = scmp.ne.s32.totalorder %s234, %s236
      %p243 = scmp.eq.s32.totalorder %s34, 1
      %p244 = por %p242, %p243
      %p245 = scmp.ne.s32.totalorder %s236, %s237
      %p246 = scmp.eq.s32.totalorder %s34, 0
      %p247 = por %p245, %p246
      %p248 = scmp.ne.s32.totalorder %s236, %s237
      %p249 = scmp.eq.s32.totalorder %s35, 1
      %p250 = por %p248, %p249
      %p252 = scmp.ne.s32.totalorder %s237, %s251
      %p253 = scmp.eq.s32.totalorder %s35, 0
      %p254 = por %p252, %p253
      %s255 = ssub.s32 %s36, %s48
      %s256 = ssub.s32 %s37, %s44
      %s257 = sor.u32 %s255, %s256
      %p258 = scmp.eq.s32.totalorder %s257, 0
      %s260 = sadd.s32 %s259, 1
      %s261 = scalar_select %p258, %s259, %s260
      %p264 = pneg %p258
      %p265 = scmp.eq.s32.totalorder %s29, 1
      %p266 = por %p264, %p265
      %p267 = scmp.ne.s32.totalorder %s259, %s262
      %p268 = scmp.eq.s32.totalorder %s29, 0
      %p269 = por %p267, %p268
      %p270 = scmp.ne.s32.totalorder %s259, %s262
      %p271 = scmp.eq.s32.totalorder %s34, 1
      %p272 = por %p270, %p271
      %p273 = scmp.ne.s32.totalorder %s262, %s263
      %p274 = scmp.eq.s32.totalorder %s34, 0
      %p275 = por %p273, %p274
      %p276 = scmp.ne.s32.totalorder %s262, %s263
      %p277 = scmp.eq.s32.totalorder %s35, 1
      %p278 = por %p276, %p277
      %p280 = scmp.ne.s32.totalorder %s263, %s279
      %p281 = scmp.eq.s32.totalorder %s35, 0
      %p282 = por %p280, %p281
      %s283 = ssub.s32 %s36, %s48
      %s284 = ssub.s32 %s37, %s44
      %s285 = sor.u32 %s283, %s284
      %p286 = scmp.eq.s32.totalorder %s285, 0
      %s288 = sadd.s32 %s287, 1
      %s289 = scalar_select %p286, %s287, %s288
      %p292 = pneg %p286
      %p293 = scmp.eq.s32.totalorder %s29, 1
      %p294 = por %p292, %p293
      %p295 = scmp.ne.s32.totalorder %s287, %s290
      %p296 = scmp.eq.s32.totalorder %s29, 0
      %p297 = por %p295, %p296
      %p298 = scmp.ne.s32.totalorder %s287, %s290
      %p299 = scmp.eq.s32.totalorder %s34, 1
      %p300 = por %p298, %p299
      %p301 = scmp.ne.s32.totalorder %s290, %s291
      %p302 = scmp.eq.s32.totalorder %s34, 0
      %p303 = por %p301, %p302
      %p304 = scmp.ne.s32.totalorder %s290, %s291
      %p305 = scmp.eq.s32.totalorder %s35, 1
      %p306 = por %p304, %p305
      %p308 = scmp.ne.s32.totalorder %s291, %s307
      %p309 = scmp.eq.s32.totalorder %s35, 0
      %p310 = por %p308, %p309
      %s311 = ssub.s32 %s36, %s48
      %s312 = ssub.s32 %s37, %s44
      %s313 = sor.u32 %s311, %s312
      %p314 = scmp.eq.s32.totalorder %s313, 0
      %s316 = sadd.s32 %s315, 1
      %s317 = scalar_select %p314, %s315, %s316
      %p320 = pneg %p314
      %p321 = scmp.eq.s32.totalorder %s29, 1
      %p322 = por %p320, %p321
      %p323 = scmp.ne.s32.totalorder %s315, %s318
      %p324 = scmp.eq.s32.totalorder %s29, 0
      %p325 = por %p323, %p324
      %p326 = scmp.ne.s32.totalorder %s315, %s318
      %p327 = scmp.eq.s32.totalorder %s34, 1
      %p328 = por %p326, %p327
      %p329 = scmp.ne.s32.totalorder %s318, %s319
      %p330 = scmp.eq.s32.totalorder %s34, 0
      %p331 = por %p329, %p330
      %p332 = scmp.ne.s32.totalorder %s318, %s319
      %p333 = scmp.eq.s32.totalorder %s35, 1
      %p334 = por %p332, %p333
      %p336 = scmp.ne.s32.totalorder %s319, %s335
      %p337 = scmp.eq.s32.totalorder %s35, 0
      %p338 = por %p336, %p337
      %p339 = scmp.le.s32.totalorder 1, %s29
      %p340 = scmp.lt.s32.totalorder %s29, 3
      %p341 = pnand %p339, %p340
      %p342 = pneg %p341
      // Predicated region
      $region9: #{tpu_custom_call.1} parent=5 // pred_check
        _
      $region10: #{tpu_custom_call.1} parent=5 // pred_check_branch
        %344 = sbr.rel (%p341) target = $region12
      $region11: #{tpu_custom_call.1} parent=5 // pred_region
        %s345 = ssub.s32 %s29, 1
        // Predicated region
        $region13: #{tpu_custom_call.1} parent=11 // pred_check
          %p346 = pneg %p142
        $region14: #{tpu_custom_call.1} parent=11 // pred_check_branch
          %348 = sbr.rel (%p346) target = $region16
        $region15: #{tpu_custom_call.1} parent=11 // pred_region
          %s350 = ssub.s32 512, 512
          %351 = vsyncadd [#allocation6], %s350
          %s352 = sshll.u32 [#allocation5], 4
          %s353 = int_to_ptr.vmem [resolvable:$true] %s352
          %358 = dma.hbm_to_vmem [thread:$0]  %s3, 512, %s353, [#allocation6], 64, 64, 4
        $region16: #{tpu_custom_call.1} parent=11 // pred_fallthru
          _
        // Predicated region
        $region17: #{tpu_custom_call.1} parent=11 // pred_check
          %p359 = pneg %p163
        $region18: #{tpu_custom_call.1} parent=11 // pred_check_branch
          %361 = sbr.rel (%p359) target = $region20
        $region19: #{tpu_custom_call.1} parent=11 // pred_region
          %s363 = ssub.s32 512, 512
          %364 = vsyncadd [#allocation6], %s363
          %s365 = sshll.u32 [#allocation7], 4
          %s366 = int_to_ptr.vmem [resolvable:$true] %s365
          %371 = dma.hbm_to_vmem [thread:$0]  %s4, 512, %s366, [#allocation6], 64, 64, 4
        $region20: #{tpu_custom_call.1} parent=11 // pred_fallthru
          _
        // Predicated region
        $region21: #{tpu_custom_call.1} parent=11 // pred_check
          %p372 = pneg %p184
        $region22: #{tpu_custom_call.1} parent=11 // pred_check_branch
          %374 = sbr.rel (%p372) target = $region24
        $region23: #{tpu_custom_call.1} parent=11 // pred_region
          %s376 = ssub.s32 512, 512
          %377 = vsyncadd [#allocation9], %s376
          %s378 = sshll.u32 [#allocation8], 4
          %s379 = int_to_ptr.vmem [resolvable:$true] %s378
          %384 = dma.hbm_to_vmem [thread:$0]  %s5, 512, %s379, [#allocation9], 64, 64, 4
        $region24: #{tpu_custom_call.1} parent=11 // pred_fallthru
          _
        // Predicated region
        $region25: #{tpu_custom_call.1} parent=11 // pred_check
          %p385 = pneg %p205
        $region26: #{tpu_custom_call.1} parent=11 // pred_check_branch
          %387 = sbr.rel (%p385) target = $region28
        $region27: #{tpu_custom_call.1} parent=11 // pred_region
          _
        $region28: #{tpu_custom_call.1} parent=11 // pred_fallthru
          _
        // Predicated region
        $region29: #{tpu_custom_call.1} parent=11 // pred_check
          %p388 = pneg %p226
        $region30: #{tpu_custom_call.1} parent=11 // pred_check_branch
          %390 = sbr.rel (%p388) target = $region32
        $region31: #{tpu_custom_call.1} parent=11 // pred_region
          _
        $region32: #{tpu_custom_call.1} parent=11 // pred_fallthru
          _
        // Predicated region
        $region33: #{tpu_custom_call.1} parent=11 // pred_check
          %p391 = pneg %p247
        $region34: #{tpu_custom_call.1} parent=11 // pred_check_branch
          %393 = sbr.rel (%p391) target = $region36
        $region35: #{tpu_custom_call.1} parent=11 // pred_region
          _
        $region36: #{tpu_custom_call.1} parent=11 // pred_fallthru
          _
      $region12: #{tpu_custom_call.1} parent=5 // pred_fallthru
        _
      %p394 = scmp.lt.s32.totalorder %s29, 2
      // Predicated region
      $region37: #{tpu_custom_call.1} parent=5 // pred_check
        %p395 = pneg %p394
      $region38: #{tpu_custom_call.1} parent=5 // pred_check_branch
        %397 = sbr.rel (%p395) target = $region40
      $region39: #{tpu_custom_call.1} parent=5 // pred_region
        // Predicated region
        $region41: #{tpu_custom_call.1} parent=39 // pred_check
          %p398 = pneg %p63
        $region42: #{tpu_custom_call.1} parent=39 // pred_check_branch
          %400 = sbr.rel (%p398) target = $region44
        $region43: #{tpu_custom_call.1} parent=39 // pred_region
          %s401 = sand.u32 %s53, 1
          %s402 = scalar_lea.sflag [#allocation3], %s401
          %s403 = sand.u32 %s53, 1
          %s404 = smul.addr %s403, 64
          %s405 = scalar_lea.vmem [#allocation2], %s404
          %s406 = smul.u32 8, %s37
          %s408 = ssub.s32 1024, 1024
          %409 = vsyncadd %s402, %s408
          %s410 = smul.addr %s36, 8
          %s411 = sadd.s32 %s406, %s410
          %s412 = smul.addr %s411, 128
          %s413 = scalar_lea.hbm %s0, %s412
          %s414 = sshll.u32 %s405, 4
          %s415 = int_to_ptr.vmem [resolvable:$true] %s414
          %420 = dma.hbm_to_vmem [thread:$0]  %s413, 1024, %s415, %s402, 128, 128, 8
        $region44: #{tpu_custom_call.1} parent=39 // pred_fallthru
          _
        // Predicated region
        $region45: #{tpu_custom_call.1} parent=39 // pred_check
          %p421 = pneg %p89
        $region46: #{tpu_custom_call.1} parent=39 // pred_check_branch
          %423 = sbr.rel (%p421) target = $region48
        $region47: #{tpu_custom_call.1} parent=39 // pred_region
          %p424 = scmp.lt.s32.totalorder %s36, 1
          %s425 = scalar_select %p424, %s36, 1
          %s426 = scalar_lea.vmem %s1, %s425
        $region48: #{tpu_custom_call.1} parent=39 // pred_fallthru
          _
        // Predicated region
        $region49: #{tpu_custom_call.1} parent=39 // pred_check
          %p427 = pneg %p115
        $region50: #{tpu_custom_call.1} parent=39 // pred_check_branch
          %429 = sbr.rel (%p427) target = $region52
        $region51: #{tpu_custom_call.1} parent=39 // pred_region
          %p430 = scmp.lt.s32.totalorder %s36, 1
          %s431 = scalar_select %p430, %s36, 1
          %s432 = scalar_lea.vmem %s2, %s431
        $region52: #{tpu_custom_call.1} parent=39 // pred_fallthru
          _
      $region40: #{tpu_custom_call.1} parent=5 // pred_fallthru
        _
      %p433 = scmp.le.s32.totalorder 1, %s29
      %p434 = scmp.lt.s32.totalorder %s29, 3
      %p435 = pnand %p433, %p434
      %p436 = pneg %p435
      // Predicated region
      $region53: #{tpu_custom_call.1} parent=5 // pred_check
        _
      $region54: #{tpu_custom_call.1} parent=5 // pred_check_branch
        %438 = sbr.rel (%p435) target = $region56
      $region55: #{tpu_custom_call.1} parent=5 // pred_region
        %s439 = ssub.s32 %s29, 1
        %s440 = sand.u32 %s56, 1
        %s441 = scalar_lea.sflag [#allocation3], %s440
        %s442 = sand.u32 %s56, 1
        %s443 = smul.addr %s442, 64
        %s444 = scalar_lea.vmem [#allocation2], %s443
        // Predicated region
        $region57: #{tpu_custom_call.1} parent=55 // pred_check
          %p445 = pneg %p69
        $region58: #{tpu_custom_call.1} parent=55 // pred_check_branch
          %447 = sbr.rel (%p445) target = $region60
        $region59: #{tpu_custom_call.1} parent=55 // pred_region
          %448 = dma.done %s441, 1024
        $region60: #{tpu_custom_call.1} parent=55 // pred_fallthru
          _
        // Predicated region
        $region61: #{tpu_custom_call.1} parent=55 // pred_check
          %p449 = pneg %p142
        $region62: #{tpu_custom_call.1} parent=55 // pred_check_branch
          %451 = sbr.rel (%p449) target = $region64
        $region63: #{tpu_custom_call.1} parent=55 // pred_region
          %452 = dma.done [#allocation6], 512
        $region64: #{tpu_custom_call.1} parent=55 // pred_fallthru
          _
        // Predicated region
        $region65: #{tpu_custom_call.1} parent=55 // pred_check
          %p453 = pneg %p163
        $region66: #{tpu_custom_call.1} parent=55 // pred_check_branch
          %455 = sbr.rel (%p453) target = $region68
        $region67: #{tpu_custom_call.1} parent=55 // pred_region
          %456 = dma.done [#allocation6], 512
        $region68: #{tpu_custom_call.1} parent=55 // pred_fallthru
          _
        // Predicated region
        $region69: #{tpu_custom_call.1} parent=55 // pred_check
          %p457 = pneg %p184
        $region70: #{tpu_custom_call.1} parent=55 // pred_check_branch
          %459 = sbr.rel (%p457) target = $region72
        $region71: #{tpu_custom_call.1} parent=55 // pred_region
          %460 = dma.done [#allocation9], 512
        $region72: #{tpu_custom_call.1} parent=55 // pred_fallthru
          _
        %s461 = sand.u32 %s56, 1
        %s462 = scalar_lea.sflag [#allocation3], %s461
        %s463 = sand.u32 %s56, 1
        %s464 = smul.addr %s463, 64
        %s465 = scalar_lea.vmem [#allocation2], %s464
        %p466 = pneg %p69
        %p467 = pneg %p66
        %p468 = scmp.lt.s32.totalorder %s38, 1
        %s469 = scalar_select %p468, %s38, 1
        %s470 = scalar_lea.vmem %s1, %s469
        %p471 = pneg %p95
        %p472 = pneg %p92
        %p473 = scmp.lt.s32.totalorder %s38, 1
        %s474 = scalar_select %p473, %s38, 1
        %s475 = scalar_lea.vmem %s2, %s474
        %p476 = pneg %p121
        %p477 = pneg %p118
        %p478 = pneg %p142
        %p479 = pneg %p139
        %p480 = pneg %p163
        %p481 = pneg %p160
        %p482 = pneg %p184
        %p483 = pneg %p181
        %p484 = pneg %p205
        %p485 = pneg %p202
        %p486 = pneg %p226
        %p487 = pneg %p223
        %p488 = pneg %p247
        %p489 = pneg %p244
        %p490 = pneg %p275
        %p491 = pneg %p272
        %s492 = sand.u32 %s262, 1
        %s493 = scalar_lea.sflag [#allocation4], %s492
        %s494 = sand.u32 %s262, 1
        %s495 = smul.addr %s494, 32
        %s496 = scalar_lea.vmem [#allocation10], %s495
        %p497 = pneg %p303
        %p498 = pneg %p300
        %s499 = sand.u32 %s34, 1
        %s500 = scalar_lea.sflag [#allocation12], %s499
        %s501 = sand.u32 %s290, 1
        %s502 = smul.addr %s501, 32
        %s503 = scalar_lea.vmem [#allocation11], %s502
        %p504 = pneg %p331
        %p505 = pneg %p328
        %s506 = sand.u32 %s34, 1
        %s507 = scalar_lea.sflag [#allocation12], %s506
        %s508 = sand.u32 %s318, 1
        %s509 = smul.addr %s508, 32
        %s510 = scalar_lea.vmem [#allocation13], %s509
        %s511 = smul.u32 8, %s39
        %p512 = scmp.lt.s32.totalorder %s38, 1
        %s513 = scalar_select %p512, %s38, 1
        %s514 = scalar_lea.vmem %s1, %s513
        %p515 = scmp.lt.s32.totalorder %s38, 1
        %s516 = scalar_select %p515, %s38, 1
        %s517 = scalar_lea.vmem %s2, %s516
        %s518 = smul.u32 8, %s39
        %s519 = smul.u32 8, %s39
        %s520 = smul.u32 8, %s39
        %v522 = vld [vmem:[%s444] sm:$0xff]
        %v523 = vld [vmem:[%s444 + $0x8] sm:$0xff]
        %v524 = vld [vmem:[%s444 + $0x10] sm:$0xff]
        %v525 = vld [vmem:[%s444 + $0x18] sm:$0xff]
        %v526 = vld [vmem:[%s444 + $0x20] sm:$0xff]
        %v527 = vld [vmem:[%s444 + $0x28] sm:$0xff]
        %v528 = vld [vmem:[%s444 + $0x30] sm:$0xff]
        %v529 = vld [vmem:[%s444 + $0x38] sm:$0xff]
        %v530 = vld [vmem:[%s514] sm:$0x1]
        %v532 = vlaneseq
        %v533 = vshrl.u32 %v532, 7
        %v534 = vsub.s32 0, %v533
        %v535 = vrot.slane %v530, %v534
        %v537 = vmul.f32 %v522, %v535
        %v538 = vmul.f32 %v523, %v535
        %v539 = vmul.f32 %v524, %v535
        %v540 = vmul.f32 %v525, %v535
        %v541 = vmul.f32 %v526, %v535
        %v542 = vmul.f32 %v527, %v535
        %v543 = vmul.f32 %v528, %v535
        %v544 = vmul.f32 %v529, %v535
        %v545 = vld [vmem:[%s517] sm:$0x1]
        %v547 = vlaneseq
        %v548 = vshrl.u32 %v547, 7
        %v549 = vsub.s32 0, %v548
        %v550 = vrot.slane %v545, %v549
        %v552 = vadd.f32 %v537, %v550
        %v553 = vadd.f32 %v538, %v550
        %v554 = vadd.f32 %v539, %v550
        %v555 = vadd.f32 %v540, %v550
        %v556 = vadd.f32 %v541, %v550
        %v557 = vadd.f32 %v542, %v550
        %v558 = vadd.f32 %v543, %v550
        %v559 = vadd.f32 %v544, %v550
        %v560 = vpack.c.bf16 %v553, %v552
        %v561 = vpack.c.bf16 %v555, %v554
        %v562 = vpack.c.bf16 %v557, %v556
        %v563 = vpack.c.bf16 %v559, %v558
        %v564 = vld [vmem:[#allocation5] sm:$0xf]
        %v565 = vld [vmem:[#allocation5 + $0x4] sm:$0xf]
        %v566 = vld [vmem:[#allocation5 + $0x8] sm:$0xf]
        %v567 = vld [vmem:[#allocation5 + $0xc] sm:$0xf]
        %v568 = vld [vmem:[#allocation5 + $0x10] sm:$0xf]
        %v569 = vld [vmem:[#allocation5 + $0x14] sm:$0xf]
        %v570 = vld [vmem:[#allocation5 + $0x18] sm:$0xf]
        %v571 = vld [vmem:[#allocation5 + $0x1c] sm:$0xf]
        %v572 = vld [vmem:[%s6] sm:$0x1]
        %v574 = vlaneseq
        %v575 = vshrl.u32 %v574, 7
        %v576 = vsub.s32 0, %v575
        %v577 = vrot.slane %v572, %v576
        %v587 = vunpack.c.l.b16 %v564
        %v588 = vunpack.c.l.b16 %v565
        %v589 = vunpack.c.l.b16 %v566
        %v590 = vunpack.c.l.b16 %v567
        %v591 = vunpack.c.l.b16 %v568
        %v592 = vunpack.c.l.b16 %v569
        %v593 = vunpack.c.l.b16 %v570
        %v594 = vunpack.c.l.b16 %v571
        %v595 = vpack.c.b16 %v588, %v587
        %v596 = vpack.c.b16 %v590, %v589
        %v597 = vpack.c.b16 %v592, %v591
        %v598 = vpack.c.b16 %v594, %v593
        %vm603 = vcmask 523264
        %v605 = vsel %vm603, %v560, 0
        %v608 = vsel %vm603, %v561, 0
        %v611 = vsel %vm603, %v562, 0
        %v614 = vsel %vm603, %v563, 0
        %616 = vmatprep.subr.bf16.mxu0 0
        %617 = vmatpush1.bf16.msra.mxu0 %v595
        %618 = vmatprep.subr.bf16.mxu0 0
        %619 = vmatpush1.bf16.msra.mxu0 %v596
        %620 = vmatprep.subr.bf16.mxu0 0
        %621 = vmatpush1.bf16.msra.mxu0 %v597
        %622 = vmatprep.subr.bf16.mxu0 0
        %623 = vmatpush1.bf16.msra.mxu0 %v598
        %624 = vmatprep.subr.bf16.mxu0 0
        %625 = vmatpush1.bf16.msra.mxu0 0
        %626 = vmatprep.subr.bf16.mxu0 0
        %627 = vmatpush1.bf16.msra.mxu0 0
        %628 = vmatprep.subr.bf16.mxu0 0
        %629 = vmatpush1.bf16.msra.mxu0 0
        %630 = vmatprep.subr.bf16.mxu0 0
        %631 = vmatpush1.bf16.msra.mxu0 0
        %632 = vmatprep.subr.bf16.mxu0 0
        %633 = vmatpush1.bf16.msra.mxu0 0
        %634 = vmatprep.subr.bf16.mxu0 0
        %635 = vmatpush1.bf16.msra.mxu0 0
        %636 = vmatprep.subr.bf16.mxu0 0
        %637 = vmatpush1.bf16.msra.mxu0 0
        %638 = vmatprep.subr.bf16.mxu0 0
        %639 = vmatpush1.bf16.msra.mxu0 0
        %640 = vmatprep.subr.bf16.mxu0 0
        %641 = vmatpush1.bf16.msra.mxu0 0
        %642 = vmatprep.subr.bf16.mxu0 0
        %643 = vmatpush1.bf16.msra.mxu0 0
        %644 = vmatprep.subr.bf16.mxu0 0
        %645 = vmatpush1.bf16.msra.mxu0 0
        %646 = vmatprep.subr.bf16.mxu0 0
        %647 = vmatpush1.bf16.msra.mxu0 0
        %648 = vmatprep.mubr.bf16.mxu0 0
        %649 = vmatmul.mubr.bf16.gmra.mrb[0].mxu0 %v605
        %v650 = vpop.f32.mrb[0].mxu0
        %v651 = vadd.f32 %v577, %v650
        %v652 = vpop.f32.mrb[0].mxu0
        %v653 = vpop.f32.mrb[0].mxu0
        %v654 = vadd.f32 %v577, %v653
        %v655 = vpop.f32.mrb[0].mxu0
        %656 = vmatprep.mubr.bf16.mxu0 0
        %657 = vmatmul.mubr.bf16.gmra.mrb[0].mxu0 %v608
        %v658 = vpop.f32.mrb[0].mxu0
        %v659 = vadd.f32 %v577, %v658
        %v660 = vpop.f32.mrb[0].mxu0
        %v661 = vpop.f32.mrb[0].mxu0
        %v662 = vadd.f32 %v577, %v661
        %v663 = vpop.f32.mrb[0].mxu0
        %664 = vmatprep.mubr.bf16.mxu0 0
        %665 = vmatmul.mubr.bf16.gmra.mrb[0].mxu0 %v611
        %v666 = vpop.f32.mrb[0].mxu0
        %v667 = vadd.f32 %v577, %v666
        %v668 = vpop.f32.mrb[0].mxu0
        %v669 = vpop.f32.mrb[0].mxu0
        %v670 = vadd.f32 %v577, %v669
        %v671 = vpop.f32.mrb[0].mxu0
        %672 = vmatprep.mubr.bf16.mxu0 0
        %673 = vmatmul.mubr.bf16.gmra.mrb[0].mxu0 %v614
        %v674 = vpop.f32.mrb[0].mxu0
        %v675 = vadd.f32 %v577, %v674
        %v676 = vpop.f32.mrb[0].mxu0
        %v677 = vpop.f32.mrb[0].mxu0
        %v678 = vadd.f32 %v577, %v677
        %v679 = vpop.f32.mrb[0].mxu0
        %680 = vdwg.mxu0
        %v681 = vpack.c.bf16 %v654, %v651
        %v682 = vpack.c.bf16 %v662, %v659
        %v683 = vpack.c.bf16 %v670, %v667
        %v684 = vpack.c.bf16 %v678, %v675
        %v689 = vunpack.c.l.b16 %v681
        %v690 = vunpack.c.h.b16 %v681
        %v691 = vunpack.c.l.b16 %v682
        %v692 = vunpack.c.h.b16 %v682
        %v693 = vunpack.c.l.b16 %v683
        %v694 = vunpack.c.h.b16 %v683
        %v695 = vunpack.c.l.b16 %v684
        %v696 = vunpack.c.h.b16 %v684
        %v697 = vpack.c.b16 %v689, %v689
        %v698 = vpack.c.b16 %v690, %v690
        %v699 = vpack.c.b16 %v691, %v691
        %v700 = vpack.c.b16 %v692, %v692
        %v701 = vpack.c.b16 %v693, %v693
        %v702 = vpack.c.b16 %v694, %v694
        %v703 = vpack.c.b16 %v695, %v695
        %v704 = vpack.c.b16 %v696, %v696
        %vm713 = vcmask 519168
        %714 = vst.msk [vmem:[%s496] sm:$0xf] %vm713, %v697
        %715 = vst.msk [vmem:[%s496 + $0x4] sm:$0xf] %vm713, %v698
        %716 = vst.msk [vmem:[%s496 + $0x8] sm:$0xf] %vm713, %v699
        %717 = vst.msk [vmem:[%s496 + $0xc] sm:$0xf] %vm713, %v700
        %718 = vst.msk [vmem:[%s496 + $0x10] sm:$0xf] %vm713, %v701
        %719 = vst.msk [vmem:[%s496 + $0x14] sm:$0xf] %vm713, %v702
        %720 = vst.msk [vmem:[%s496 + $0x18] sm:$0xf] %vm713, %v703
        %721 = vst.msk [vmem:[%s496 + $0x1c] sm:$0xf] %vm713, %v704
        %v722 = vld [vmem:[#allocation7] sm:$0xf]
        %v723 = vld [vmem:[#allocation7 + $0x4] sm:$0xf]
        %v724 = vld [vmem:[#allocation7 + $0x8] sm:$0xf]
        %v725 = vld [vmem:[#allocation7 + $0xc] sm:$0xf]
        %v726 = vld [vmem:[#allocation7 + $0x10] sm:$0xf]
        %v727 = vld [vmem:[#allocation7 + $0x14] sm:$0xf]
        %v728 = vld [vmem:[#allocation7 + $0x18] sm:$0xf]
        %v729 = vld [vmem:[#allocation7 + $0x1c] sm:$0xf]
        %v730 = vld [vmem:[%s7] sm:$0x1]
        %v732 = vlaneseq
        %v733 = vshrl.u32 %v732, 7
        %v734 = vsub.s32 0, %v733
        %v735 = vrot.slane %v730, %v734
        %v745 = vunpack.c.l.b16 %v722
        %v746 = vunpack.c.l.b16 %v723
        %v747 = vunpack.c.l.b16 %v724
        %v748 = vunpack.c.l.b16 %v725
        %v749 = vunpack.c.l.b16 %v726
        %v750 = vunpack.c.l.b16 %v727
        %v751 = vunpack.c.l.b16 %v728
        %v752 = vunpack.c.l.b16 %v729
        %v753 = vpack.c.b16 %v746, %v745
        %v754 = vpack.c.b16 %v748, %v747
        %v755 = vpack.c.b16 %v750, %v749
        %v756 = vpack.c.b16 %v752, %v751
        %761 = vmatprep.subr.bf16.mxu0 0
        %762 = vmatpush1.bf16.msra.mxu0 %v753
        %763 = vmatprep.subr.bf16.mxu0 0
        %764 = vmatpush1.bf16.msra.mxu0 %v754
        %765 = vmatprep.subr.bf16.mxu0 0
        %766 = vmatpush1.bf16.msra.mxu0 %v755
        %767 = vmatprep.subr.bf16.mxu0 0
        %768 = vmatpush1.bf16.msra.mxu0 %v756
        %769 = vmatprep.subr.bf16.mxu0 0
        %770 = vmatpush1.bf16.msra.mxu0 0
        %771 = vmatprep.subr.bf16.mxu0 0
        %772 = vmatpush1.bf16.msra.mxu0 0
        %773 = vmatprep.subr.bf16.mxu0 0
        %774 = vmatpush1.bf16.msra.mxu0 0
        %775 = vmatprep.subr.bf16.mxu0 0
        %776 = vmatpush1.bf16.msra.mxu0 0
        %777 = vmatprep.subr.bf16.mxu0 0
        %778 = vmatpush1.bf16.msra.mxu0 0
        %779 = vmatprep.subr.bf16.mxu0 0
        %780 = vmatpush1.bf16.msra.mxu0 0
        %781 = vmatprep.subr.bf16.mxu0 0
        %782 = vmatpush1.bf16.msra.mxu0 0
        %783 = vmatprep.subr.bf16.mxu0 0
        %784 = vmatpush1.bf16.msra.mxu0 0
        %785 = vmatprep.subr.bf16.mxu0 0
        %786 = vmatpush1.bf16.msra.mxu0 0
        %787 = vmatprep.subr.bf16.mxu0 0
        %788 = vmatpush1.bf16.msra.mxu0 0
        %789 = vmatprep.subr.bf16.mxu0 0
        %790 = vmatpush1.bf16.msra.mxu0 0
        %791 = vmatprep.subr.bf16.mxu0 0
        %792 = vmatpush1.bf16.msra.mxu0 0
        %793 = vmatprep.mubr.bf16.mxu0 0
        %794 = vmatmul.mubr.bf16.gmra.mrb[0].mxu0 %v605
        %v795 = vpop.f32.mrb[0].mxu0
        %v796 = vadd.f32 %v735, %v795
        %v797 = vpop.f32.mrb[0].mxu0
        %v798 = vpop.f32.mrb[0].mxu0
        %v799 = vadd.f32 %v735, %v798
        %v800 = vpop.f32.mrb[0].mxu0
        %801 = vmatprep.mubr.bf16.mxu0 0
        %802 = vmatmul.mubr.bf16.gmra.mrb[0].mxu0 %v608
        %v803 = vpop.f32.mrb[0].mxu0
        %v804 = vadd.f32 %v735, %v803
        %v805 = vpop.f32.mrb[0].mxu0
        %v806 = vpop.f32.mrb[0].mxu0
        %v807 = vadd.f32 %v735, %v806
        %v808 = vpop.f32.mrb[0].mxu0
        %809 = vmatprep.mubr.bf16.mxu0 0
        %810 = vmatmul.mubr.bf16.gmra.mrb[0].mxu0 %v611
        %v811 = vpop.f32.mrb[0].mxu0
        %v812 = vadd.f32 %v735, %v811
        %v813 = vpop.f32.mrb[0].mxu0
        %v814 = vpop.f32.mrb[0].mxu0
        %v815 = vadd.f32 %v735, %v814
        %v816 = vpop.f32.mrb[0].mxu0
        %817 = vmatprep.mubr.bf16.mxu0 0
        %818 = vmatmul.mubr.bf16.gmra.mrb[0].mxu0 %v614
        %v819 = vpop.f32.mrb[0].mxu0
        %v820 = vadd.f32 %v735, %v819
        %v821 = vpop.f32.mrb[0].mxu0
        %v822 = vpop.f32.mrb[0].mxu0
        %v823 = vadd.f32 %v735, %v822
        %v824 = vpop.f32.mrb[0].mxu0
        %825 = vdwg.mxu0
        %v826 = vpack.c.bf16 %v799, %v796
        %v827 = vpack.c.bf16 %v807, %v804
        %v828 = vpack.c.bf16 %v815, %v812
        %v829 = vpack.c.bf16 %v823, %v820
        %v834 = vunpack.c.l.b16 %v826
        %v835 = vunpack.c.h.b16 %v826
        %v836 = vunpack.c.l.b16 %v827
        %v837 = vunpack.c.h.b16 %v827
        %v838 = vunpack.c.l.b16 %v828
        %v839 = vunpack.c.h.b16 %v828
        %v840 = vunpack.c.l.b16 %v829
        %v841 = vunpack.c.h.b16 %v829
        %v842 = vpack.c.b16 %v834, %v834
        %v843 = vpack.c.b16 %v835, %v835
        %v844 = vpack.c.b16 %v836, %v836
        %v845 = vpack.c.b16 %v837, %v837
        %v846 = vpack.c.b16 %v838, %v838
        %v847 = vpack.c.b16 %v839, %v839
        %v848 = vpack.c.b16 %v840, %v840
        %v849 = vpack.c.b16 %v841, %v841
        %858 = vst.msk [vmem:[%s503] sm:$0xf] %vm713, %v842
        %859 = vst.msk [vmem:[%s503 + $0x4] sm:$0xf] %vm713, %v843
        %860 = vst.msk [vmem:[%s503 + $0x8] sm:$0xf] %vm713, %v844
        %861 = vst.msk [vmem:[%s503 + $0xc] sm:$0xf] %vm713, %v845
        %862 = vst.msk [vmem:[%s503 + $0x10] sm:$0xf] %vm713, %v846
        %863 = vst.msk [vmem:[%s503 + $0x14] sm:$0xf] %vm713, %v847
        %864 = vst.msk [vmem:[%s503 + $0x18] sm:$0xf] %vm713, %v848
        %865 = vst.msk [vmem:[%s503 + $0x1c] sm:$0xf] %vm713, %v849
        %v866 = vld [vmem:[#allocation8] sm:$0xf]
        %v867 = vld [vmem:[#allocation8 + $0x4] sm:$0xf]
        %v868 = vld [vmem:[#allocation8 + $0x8] sm:$0xf]
        %v869 = vld [vmem:[#allocation8 + $0xc] sm:$0xf]
        %v870 = vld [vmem:[#allocation8 + $0x10] sm:$0xf]
        %v871 = vld [vmem:[#allocation8 + $0x14] sm:$0xf]
        %v872 = vld [vmem:[#allocation8 + $0x18] sm:$0xf]
        %v873 = vld [vmem:[#allocation8 + $0x1c] sm:$0xf]
        %v874 = vld [vmem:[%s8] sm:$0x1]
        %v876 = vlaneseq
        %v877 = vshrl.u32 %v876, 7
        %v878 = vsub.s32 0, %v877
        %v879 = vrot.slane %v874, %v878
        %v889 = vunpack.c.l.b16 %v866
        %v890 = vunpack.c.l.b16 %v867
        %v891 = vunpack.c.l.b16 %v868
        %v892 = vunpack.c.l.b16 %v869
        %v893 = vunpack.c.l.b16 %v870
        %v894 = vunpack.c.l.b16 %v871
        %v895 = vunpack.c.l.b16 %v872
        %v896 = vunpack.c.l.b16 %v873
        %v897 = vpack.c.b16 %v890, %v889
        %v898 = vpack.c.b16 %v892, %v891
        %v899 = vpack.c.b16 %v894, %v893
        %v900 = vpack.c.b16 %v896, %v895
        %905 = vmatprep.subr.bf16.mxu0 0
        %906 = vmatpush1.bf16.msra.mxu0 %v897
        %907 = vmatprep.subr.bf16.mxu0 0
        %908 = vmatpush1.bf16.msra.mxu0 %v898
        %909 = vmatprep.subr.bf16.mxu0 0
        %910 = vmatpush1.bf16.msra.mxu0 %v899
        %911 = vmatprep.subr.bf16.mxu0 0
        %912 = vmatpush1.bf16.msra.mxu0 %v900
        %913 = vmatprep.subr.bf16.mxu0 0
        %914 = vmatpush1.bf16.msra.mxu0 0
        %915 = vmatprep.subr.bf16.mxu0 0
        %916 = vmatpush1.bf16.msra.mxu0 0
        %917 = vmatprep.subr.bf16.mxu0 0
        %918 = vmatpush1.bf16.msra.mxu0 0
        %919 = vmatprep.subr.bf16.mxu0 0
        %920 = vmatpush1.bf16.msra.mxu0 0
        %921 = vmatprep.subr.bf16.mxu0 0
        %922 = vmatpush1.bf16.msra.mxu0 0
        %923 = vmatprep.subr.bf16.mxu0 0
        %924 = vmatpush1.bf16.msra.mxu0 0
        %925 = vmatprep.subr.bf16.mxu0 0
        %926 = vmatpush1.bf16.msra.mxu0 0
        %927 = vmatprep.subr.bf16.mxu0 0
        %928 = vmatpush1.bf16.msra.mxu0 0
        %929 = vmatprep.subr.bf16.mxu0 0
        %930 = vmatpush1.bf16.msra.mxu0 0
        %931 = vmatprep.subr.bf16.mxu0 0
        %932 = vmatpush1.bf16.msra.mxu0 0
        %933 = vmatprep.subr.bf16.mxu0 0
        %934 = vmatpush1.bf16.msra.mxu0 0
        %935 = vmatprep.subr.bf16.mxu0 0
        %936 = vmatpush1.bf16.msra.mxu0 0
        %937 = vmatprep.mubr.bf16.mxu0 0
        %938 = vmatmul.mubr.bf16.gmra.mrb[0].mxu0 %v605
        %v939 = vpop.f32.mrb[0].mxu0
        %v940 = vadd.f32 %v879, %v939
        %v941 = vpop.f32.mrb[0].mxu0
        %v942 = vpop.f32.mrb[0].mxu0
        %v943 = vadd.f32 %v879, %v942
        %v944 = vpop.f32.mrb[0].mxu0
        %945 = vmatprep.mubr.bf16.mxu0 0
        %946 = vmatmul.mubr.bf16.gmra.mrb[0].mxu0 %v608
        %v947 = vpop.f32.mrb[0].mxu0
        %v948 = vadd.f32 %v879, %v947
        %v949 = vpop.f32.mrb[0].mxu0
        %v950 = vpop.f32.mrb[0].mxu0
        %v951 = vadd.f32 %v879, %v950
        %v952 = vpop.f32.mrb[0].mxu0
        %953 = vmatprep.mubr.bf16.mxu0 0
        %954 = vmatmul.mubr.bf16.gmra.mrb[0].mxu0 %v611
        %v955 = vpop.f32.mrb[0].mxu0
        %v956 = vadd.f32 %v879, %v955
        %v957 = vpop.f32.mrb[0].mxu0
        %v958 = vpop.f32.mrb[0].mxu0
        %v959 = vadd.f32 %v879, %v958
        %v960 = vpop.f32.mrb[0].mxu0
        %961 = vmatprep.mubr.bf16.mxu0 0
        %962 = vmatmul.mubr.bf16.gmra.mrb[0].mxu0 %v614
        %v963 = vpop.f32.mrb[0].mxu0
        %v964 = vadd.f32 %v879, %v963
        %v965 = vpop.f32.mrb[0].mxu0
        %v966 = vpop.f32.mrb[0].mxu0
        %v967 = vadd.f32 %v879, %v966
        %v968 = vpop.f32.mrb[0].mxu0
        %969 = vdwg.mxu0
        %v970 = vpack.c.bf16 %v943, %v940
        %v971 = vpack.c.bf16 %v951, %v948
        %v972 = vpack.c.bf16 %v959, %v956
        %v973 = vpack.c.bf16 %v967, %v964
        %v978 = vunpack.c.l.b16 %v970
        %v979 = vunpack.c.h.b16 %v970
        %v980 = vunpack.c.l.b16 %v971
        %v981 = vunpack.c.h.b16 %v971
        %v982 = vunpack.c.l.b16 %v972
        %v983 = vunpack.c.h.b16 %v972
        %v984 = vunpack.c.l.b16 %v973
        %v985 = vunpack.c.h.b16 %v973
        %v986 = vpack.c.b16 %v978, %v978
        %v987 = vpack.c.b16 %v979, %v979
        %v988 = vpack.c.b16 %v980, %v980
        %v989 = vpack.c.b16 %v981, %v981
        %v990 = vpack.c.b16 %v982, %v982
        %v991 = vpack.c.b16 %v983, %v983
        %v992 = vpack.c.b16 %v984, %v984
        %v993 = vpack.c.b16 %v985, %v985
        %1002 = vst.msk [vmem:[%s510] sm:$0xf] %vm713, %v986
        %1003 = vst.msk [vmem:[%s510 + $0x4] sm:$0xf] %vm713, %v987
        %1004 = vst.msk [vmem:[%s510 + $0x8] sm:$0xf] %vm713, %v988
        %1005 = vst.msk [vmem:[%s510 + $0xc] sm:$0xf] %vm713, %v989
        %1006 = vst.msk [vmem:[%s510 + $0x10] sm:$0xf] %vm713, %v990
        %1007 = vst.msk [vmem:[%s510 + $0x14] sm:$0xf] %vm713, %v991
        %1008 = vst.msk [vmem:[%s510 + $0x18] sm:$0xf] %vm713, %v992
        %1009 = vst.msk [vmem:[%s510 + $0x1c] sm:$0xf] %vm713, %v993
        %s1010 = sand.u32 %s262, 1
        %s1011 = scalar_lea.sflag [#allocation4], %s1010
        %s1012 = sand.u32 %s262, 1
        %s1013 = smul.addr %s1012, 32
        %s1014 = scalar_lea.vmem [#allocation10], %s1013
        %s1015 = sand.u32 %s34, 1
        %s1016 = scalar_lea.sflag [#allocation12], %s1015
        %s1017 = sand.u32 %s290, 1
        %s1018 = smul.addr %s1017, 32
        %s1019 = scalar_lea.vmem [#allocation11], %s1018
        %s1020 = sand.u32 %s34, 1
        %s1021 = scalar_lea.sflag [#allocation12], %s1020
        %s1022 = sand.u32 %s318, 1
        %s1023 = smul.addr %s1022, 32
        %s1024 = scalar_lea.vmem [#allocation13], %s1023
        // Predicated region
        $region73: #{tpu_custom_call.1} parent=55 // pred_check
          %p1025 = pneg %p272
        $region74: #{tpu_custom_call.1} parent=55 // pred_check_branch
          %1027 = sbr.rel (%p1025) target = $region76
        $region75: #{tpu_custom_call.1} parent=55 // pred_region
          %s1028 = smul.u32 8, %s39
          %s1030 = ssub.s32 512, 512
          %1031 = vsyncadd %s1011, %s1030
          %s1032 = smul.addr %s38, 8
          %s1033 = sadd.s32 %s1028, %s1032
          %s1034 = smul.addr %s1033, 64
          %s1035 = scalar_lea.hbm %s9, %s1034
          %s1036 = sshll.u32 %s1014, 4
          %s1037 = int_to_ptr.vmem [resolvable:$true] %s1036
          %1042 = dma.vmem_to_hbm [thread:$0]  %s1037, 512, %s1035, %s1011, 64, 64, 4
        $region76: #{tpu_custom_call.1} parent=55 // pred_fallthru
          _
        // Predicated region
        $region77: #{tpu_custom_call.1} parent=55 // pred_check
          %p1043 = pneg %p300
        $region78: #{tpu_custom_call.1} parent=55 // pred_check_branch
          %1045 = sbr.rel (%p1043) target = $region80
        $region79: #{tpu_custom_call.1} parent=55 // pred_region
          %s1046 = smul.u32 8, %s39
          %s1048 = ssub.s32 512, 512
          %1049 = vsyncadd %s1016, %s1048
          %s1050 = smul.addr %s38, 8
          %s1051 = sadd.s32 %s1046, %s1050
          %s1052 = smul.addr %s1051, 64
          %s1053 = scalar_lea.hbm %s10, %s1052
          %s1054 = sshll.u32 %s1019, 4
          %s1055 = int_to_ptr.vmem [resolvable:$true] %s1054
          %1060 = dma.vmem_to_hbm [thread:$0]  %s1055, 512, %s1053, %s1016, 64, 64, 4
        $region80: #{tpu_custom_call.1} parent=55 // pred_fallthru
          _
        // Predicated region
        $region81: #{tpu_custom_call.1} parent=55 // pred_check
          %p1061 = pneg %p328
        $region82: #{tpu_custom_call.1} parent=55 // pred_check_branch
          %1063 = sbr.rel (%p1061) target = $region84
        $region83: #{tpu_custom_call.1} parent=55 // pred_region
          %s1064 = smul.u32 8, %s39
          %s1066 = ssub.s32 512, 512
          %1067 = vsyncadd %s1021, %s1066
          %s1068 = smul.addr %s38, 8
          %s1069 = sadd.s32 %s1064, %s1068
          %s1070 = smul.addr %s1069, 64
          %s1071 = scalar_lea.hbm %s11, %s1070
          %s1072 = sshll.u32 %s1024, 4
          %s1073 = int_to_ptr.vmem [resolvable:$true] %s1072
          %1078 = dma.vmem_to_hbm [thread:$0]  %s1073, 512, %s1071, %s1021, 64, 64, 4
        $region84: #{tpu_custom_call.1} parent=55 // pred_fallthru
          _
      $region56: #{tpu_custom_call.1} parent=5 // pred_fallthru
        _
      %p1079 = scmp.le.s32.totalorder 2, %s29
      // Predicated region
      $region85: #{tpu_custom_call.1} parent=5 // pred_check
        %p1080 = pneg %p1079
      $region86: #{tpu_custom_call.1} parent=5 // pred_check_branch
        %1082 = sbr.rel (%p1080) target = $region88
      $region87: #{tpu_custom_call.1} parent=5 // pred_region
        %s1083 = ssub.s32 %s29, 2
        // Predicated region
        $region89: #{tpu_custom_call.1} parent=87 // pred_check
          %p1084 = pneg %p278
        $region90: #{tpu_custom_call.1} parent=87 // pred_check_branch
          %1086 = sbr.rel (%p1084) target = $region92
        $region91: #{tpu_custom_call.1} parent=87 // pred_region
          %s1087 = sand.u32 %s263, 1
          %s1088 = scalar_lea.sflag [#allocation4], %s1087
          %s1089 = sand.u32 %s263, 1
          %s1090 = smul.addr %s1089, 32
          %s1091 = scalar_lea.vmem [#allocation10], %s1090
          %1092 = dma.done %s1088, 512
        $region92: #{tpu_custom_call.1} parent=87 // pred_fallthru
          _
        // Predicated region
        $region93: #{tpu_custom_call.1} parent=87 // pred_check
          %p1093 = pneg %p306
        $region94: #{tpu_custom_call.1} parent=87 // pred_check_branch
          %1095 = sbr.rel (%p1093) target = $region96
        $region95: #{tpu_custom_call.1} parent=87 // pred_region
          %s1096 = sand.u32 %s35, 1
          %s1097 = scalar_lea.sflag [#allocation12], %s1096
          %s1098 = sand.u32 %s291, 1
          %s1099 = smul.addr %s1098, 32
          %s1100 = scalar_lea.vmem [#allocation11], %s1099
          %1101 = dma.done %s1097, 512
        $region96: #{tpu_custom_call.1} parent=87 // pred_fallthru
          _
        // Predicated region
        $region97: #{tpu_custom_call.1} parent=87 // pred_check
          %p1102 = pneg %p334
        $region98: #{tpu_custom_call.1} parent=87 // pred_check_branch
          %1104 = sbr.rel (%p1102) target = $region100
        $region99: #{tpu_custom_call.1} parent=87 // pred_region
          %s1105 = sand.u32 %s35, 1
          %s1106 = scalar_lea.sflag [#allocation12], %s1105
          %s1107 = sand.u32 %s319, 1
          %s1108 = smul.addr %s1107, 32
          %s1109 = scalar_lea.vmem [#allocation13], %s1108
          %1110 = dma.done %s1106, 512
        $region100: #{tpu_custom_call.1} parent=87 // pred_fallthru
          _
      $region88: #{tpu_custom_call.1} parent=5 // pred_fallthru
        _
    $region6: #{tpu_custom_call.1} parent=1 // loop_footer
      %s33 = sadd.s32 1, %s29
    $region7: #{tpu_custom_call.1} parent=1 // loop_footer_branch
      %28 = sbr.rel target = $region3
    $region8: #{tpu_custom_call.1} parent=1 // loop_exit
      _
    %1111 = vsyncpa [#allocation3], 1
    %s1112 = scalar_lea.sflag [#allocation3], 1
    %1113 = vsyncpa %s1112, 1
    %1114 = vsyncpa [#allocation6], 1
    %1115 = vsyncpa [#allocation9], 1
    %1116 = vsyncpa [#allocation4], 1
    %s1117 = scalar_lea.sflag [#allocation4], 1
    %1118 = vsyncpa %s1117, 1
    %1119 = vsyncpa [#allocation12], 1
    %s1120 = scalar_lea.sflag [#allocation12], 1
    %1121 = vsyncpa %s1120, 1

</llo_original>
